<compile_context>
chip_gen: v6e
topology: v6e:2x2x1
jax: 0.10.0
libtpu: 0.0.40
codegen_flags: <defaults>
</compile_context>

<pallas_src>
import functools

import jax
import jax.numpy as jnp
from jax.experimental import pallas as pl
from jax.experimental.pallas import tpu as pltpu

_LANES = 128
_MAX_TILE_ROWS = 4096  # 2 MiB f32 input tile; ~8 MiB double-buffered I/O


def _iou_partial_kernel(p_ref, t_ref, o_ref, inter_acc, sum_acc, *,
                        tile_rows, acc_rows, rows_total, steps_per_shard):
    """Accumulate (sum(p*t), sum(p+t)) partials per shard; finalize on last step."""
    c = pl.program_id(0)   # shard (TensorCore) index
    i = pl.program_id(1)   # streaming step within the shard

    @pl.when(i == 0)
    def _():
        inter_acc[...] = jnp.zeros_like(inter_acc)
        sum_acc[...] = jnp.zeros_like(sum_acc)

    groups = tile_rows // acc_rows

    def _accumulate(mask_start_row):
        p = p_ref[...].astype(jnp.float32)
        t = t_ref[...].astype(jnp.float32)
        if mask_start_row is not None:
            row = jax.lax.broadcasted_iota(jnp.int32, (tile_rows, _LANES), 0)
            valid = (row + mask_start_row) < rows_total
            p = jnp.where(valid, p, 0.0)
            t = jnp.where(valid, t, 0.0)
        # Leading-axis-only regroup: never crosses (8,128) sublane tiles, so no
        # hidden VMEM relayout; the sum(axis=0) is pure cross-vreg VALU adds.
        inter_acc[...] += (p * t).reshape(groups, acc_rows, _LANES).sum(axis=0)
        sum_acc[...] += (p + t).reshape(groups, acc_rows, _LANES).sum(axis=0)

    # Logical (unclamped) row offset of this step's block. The index_map clamps
    # the actual DMA to a valid block; the mask below (based on the logical
    # offset) zeroes any overhang / phantom block so it contributes nothing.
    start_row = (c * steps_per_shard + i) * tile_rows
    block_full = start_row + tile_rows <= rows_total

    @pl.when(block_full)
    def _():
        _accumulate(None)

    @pl.when(jnp.logical_not(block_full))
    def _():
        _accumulate(start_row)

    @pl.when(i == steps_per_shard - 1)
    def _():
        inter = jnp.sum(inter_acc[...])
        ssum = jnp.sum(sum_acc[...])
        sub = jax.lax.broadcasted_iota(jnp.int32, (1, 8, _LANES), 1)
        lane = jax.lax.broadcasted_iota(jnp.int32, (1, 8, _LANES), 2)
        first = (sub == 0) & (lane == 0)
        second = (sub == 0) & (lane == 1)
        o_ref[...] = jnp.where(first, inter, jnp.where(second, ssum, 0.0))


def iou_loss(pred: jax.Array, target: jax.Array) -> jax.Array:
    """Soft IoU loss over the whole tensor. pred/target: any (same) shape."""
    assert pred.shape == target.shape
    total = pred.size

    flat_p = pred.reshape(-1)          # free bitcast reshape, native dtype
    flat_t = target.reshape(-1)
    aligned = (total // _LANES) * _LANES
    rem = total - aligned

    # <128-element tail folded on the host-side graph (tiny), so no full-tensor
    # pad copy is ever materialized for the kernel.
    if rem:
        tp = flat_p[aligned:].astype(jnp.float32)
        tt = flat_t[aligned:].astype(jnp.float32)
        tail_inter = jnp.sum(tp * tt)
        tail_sum = jnp.sum(tp + tt)
    else:
        tail_inter = jnp.float32(0.0)
        tail_sum = jnp.float32(0.0)

    rows = aligned // _LANES
    if rows == 0:
        inter = tail_inter
        ssum = tail_sum
    else:
        if rem:
            p2 = flat_p[:aligned].reshape(rows, _LANES)
            t2 = flat_t[:aligned].reshape(rows, _LANES)
        else:
            p2 = flat_p.reshape(rows, _LANES)   # free reshape, no copy
            t2 = flat_t.reshape(rows, _LANES)

        tile_rows = rows if rows <= _MAX_TILE_ROWS else _MAX_TILE_ROWS
        nblocks = pl.cdiv(rows, tile_rows)
        n_shards = 2 if nblocks >= 2 else 1         # use both TCs on v7x
        spc = pl.cdiv(nblocks, n_shards)            # steps per shard

        if tile_rows % 64 == 0:
            acc_rows = 64
        elif tile_rows % 8 == 0:
            acc_rows = 8
        else:
            acc_rows = tile_rows

        def in_map(c, i):
            blk = c * spc + i
            return (jnp.minimum(blk, nblocks - 1), 0)   # clamp phantom blocks

        def out_map(c, i):
            return (c, 0, 0)

        kernel = functools.partial(
            _iou_partial_kernel,
            tile_rows=tile_rows,
            acc_rows=acc_rows,
            rows_total=rows,
            steps_per_shard=spc,
        )

        out = pl.pallas_call(
            kernel,
            out_shape=jax.ShapeDtypeStruct((n_shards, 8, _LANES), jnp.float32),
            grid_spec=pltpu.PrefetchScalarGridSpec(
                num_scalar_prefetch=0,
                grid=(n_shards, spc),
                in_specs=[
                    pl.BlockSpec((tile_rows, _LANES), in_map),
                    pl.BlockSpec((tile_rows, _LANES), in_map),
                ],
                out_specs=pl.BlockSpec((1, 8, _LANES), out_map),
                scratch_shapes=[
                    pltpu.VMEM((acc_rows, _LANES), jnp.float32),  # inter partial
                    pltpu.VMEM((acc_rows, _LANES), jnp.float32),  # sum partial
                ],
            ),
            compiler_params=pltpu.CompilerParams(
                dimension_semantics=("parallel", "arbitrary"),
                vmem_limit_bytes=32 * 1024 * 1024,
            ),
        )(p2, t2)

        inter = jnp.sum(out[:, 0, 0]) + tail_inter
        ssum = jnp.sum(out[:, 0, 1]) + tail_sum

    union = ssum - inter
    return 1.0 - inter / (union + jnp.float32(1e-6))


def iou_loss_ref(pred, target):
    p = pred.astype(jnp.float32)
    t = target.astype(jnp.float32)
    inter = jnp.sum(p * t)
    union = jnp.sum(p) + jnp.sum(t) - inter
    return 1.0 - inter / (union + 1e-6)


if __name__ == "__main__":
    key = jax.random.PRNGKey(0)
    k1, k2 = jax.random.split(key)
    # NCHW: batch=2, channels=4, spatial=16x16 (lane-aligned, single-block path)
    pred = jax.nn.sigmoid(jax.random.normal(k1, (2, 4, 16, 16), dtype=jnp.float32))
    target = (jax.random.uniform(k2, (2, 4, 16, 16)) > 0.5).astype(jnp.float32)

    loss = jax.block_until_ready(iou_loss(pred, target))
    ref = jax.block_until_ready(iou_loss_ref(pred, target))
    assert jnp.allclose(loss, ref, atol=1e-5, rtol=1e-5), (loss, ref)

    # Non-lane-aligned total: exercises the wrapper-side tail fold.
    k3, k4 = jax.random.split(k2)
    odd_pred = jax.nn.sigmoid(jax.random.normal(k3, (3, 5, 300, 7), dtype=jnp.float32))
    odd_tgt = (jax.random.uniform(k4, (3, 5, 300, 7)) > 0.5).astype(jnp.float32)
    odd_loss = jax.block_until_ready(iou_loss(odd_pred, odd_tgt))
    odd_ref = jax.block_until_ready(iou_loss_ref(odd_pred, odd_tgt))
    assert jnp.allclose(odd_loss, odd_ref, atol=1e-5, rtol=1e-4), (odd_loss, odd_ref)

    # Multi-block case (rows > tile): exercises the 2-shard grid, per-step
    # accumulation, the partial-block mask branch and a phantom clamped block.
    k5, k6 = jax.random.split(k4)
    big_pred = jax.nn.sigmoid(jax.random.normal(k5, (2, 4, 520, 512), dtype=jnp.float32))
    big_tgt = (jax.random.uniform(k6, (2, 4, 520, 512)) > 0.5).astype(jnp.float32)
    big_loss = jax.block_until_ready(iou_loss(big_pred, big_tgt))
    big_ref = jax.block_until_ready(iou_loss_ref(big_pred, big_tgt))
    assert jnp.allclose(big_loss, big_ref, atol=1e-5, rtol=1e-4), (big_loss, big_ref)

    print("KERNEL_OK")
</pallas_src>

<mosaic_0001>
module attributes {stable_mosaic.version = 11 : i64} {
  func.func @_iou_partial_kernel(%arg0: i32, %arg1: i32, %arg2: memref<16x128xf32, #tpu.memory_space<vmem>>, %arg3: memref<16x128xf32, #tpu.memory_space<vmem>>, %arg4: memref<1x8x128xf32, #tpu.memory_space<vmem>>, %arg5: memref<8x128xf32, #tpu.memory_space<vmem>>, %arg6: memref<8x128xf32, #tpu.memory_space<vmem>>) attributes {dimension_semantics = [#tpu.dimension_semantics<parallel>, #tpu.dimension_semantics<arbitrary>], iteration_bounds = array<i64: 1, 1>, scalar_prefetch = 0 : i64, scratch_operands = 2 : i64, tpu.core_type = #tpu.core_type<tc>, window_params = [{transform_indices = @transform_0, window_bounds = array<i64: 16, 128>}, {transform_indices = @transform_1, window_bounds = array<i64: 16, 128>}, {transform_indices = @transform_2, window_bounds = array<i64: 1, 8, 128>}]} {
    %c0_i32 = arith.constant 0 : i32
    %0 = arith.cmpi eq, %arg1, %c0_i32 : i32
    %1 = arith.extui %0 : i1 to i32
    %c0_i32_0 = arith.constant 0 : i32
    %2 = arith.cmpi ne, %1, %c0_i32_0 : i32
    scf.if %2 {
      %cst = arith.constant 0.000000e+00 : f32
      %16 = vector.broadcast %cst : f32 to vector<8x128xf32>
      %c0 = arith.constant 0 : index
      %c0_7 = arith.constant 0 : index
      %17 = vector.load %arg5[%c0, %c0_7] : memref<8x128xf32, #tpu.memory_space<vmem>>, vector<8x128xf32>
      tpu.vector_store %arg5[%c0, %c0_7], %16 {strides = array<i32>} : memref<8x128xf32, #tpu.memory_space<vmem>>, vector<8x128xf32>,
      %cst_8 = arith.constant 0.000000e+00 : f32
      %18 = vector.broadcast %cst_8 : f32 to vector<8x128xf32>
      %c0_9 = arith.constant 0 : index
      %c0_10 = arith.constant 0 : index
      %19 = vector.load %arg6[%c0_9, %c0_10] : memref<8x128xf32, #tpu.memory_space<vmem>>, vector<8x128xf32>
      tpu.vector_store %arg6[%c0_9, %c0_10], %18 {strides = array<i32>} : memref<8x128xf32, #tpu.memory_space<vmem>>, vector<8x128xf32>,
    } else {
    }
    %c1_i32 = arith.constant 1 : i32
    %3 = arith.muli %arg0, %c1_i32 : i32
    %4 = arith.addi %3, %arg1 : i32
    %c16_i32 = arith.constant 16 : i32
    %5 = arith.muli %4, %c16_i32 : i32
    %c16_i32_1 = arith.constant 16 : i32
    %6 = arith.addi %5, %c16_i32_1 : i32
    %c16_i32_2 = arith.constant 16 : i32
    %7 = arith.cmpi sle, %6, %c16_i32_2 : i32
    %8 = arith.extui %7 : i1 to i32
    %c0_i32_3 = arith.constant 0 : i32
    %9 = arith.cmpi ne, %8, %c0_i32_3 : i32
    scf.if %9 {
      %c0 = arith.constant 0 : index
      %c0_7 = arith.constant 0 : index
      %16 = vector.load %arg2[%c0, %c0_7] : memref<16x128xf32, #tpu.memory_space<vmem>>, vector<16x128xf32>
      %c0_8 = arith.constant 0 : index
      %c0_9 = arith.constant 0 : index
      %17 = vector.load %arg3[%c0_8, %c0_9] : memref<16x128xf32, #tpu.memory_space<vmem>>, vector<16x128xf32>
      %c0_10 = arith.constant 0 : index
      %c0_11 = arith.constant 0 : index
      %18 = vector.load %arg5[%c0_10, %c0_11] : memref<8x128xf32, #tpu.memory_space<vmem>>, vector<8x128xf32>
      %19 = arith.mulf %16, %17 : vector<16x128xf32>
      %20 = vector.shape_cast %19 : vector<16x128xf32> to vector<2x8x128xf32>
      %cst = arith.constant dense<0.000000e+00> : vector<8x128xf32>
      %21 = vector.multi_reduction <add>, %20, %cst [0] : vector<2x8x128xf32> to vector<8x128xf32>
      %22 = arith.addf %18, %21 : vector<8x128xf32>
      %c0_12 = arith.constant 0 : index
      %c0_13 = arith.constant 0 : index
      %23 = vector.load %arg5[%c0_12, %c0_13] : memref<8x128xf32, #tpu.memory_space<vmem>>, vector<8x128xf32>
      tpu.vector_store %arg5[%c0_12, %c0_13], %22 {strides = array<i32>} : memref<8x128xf32, #tpu.memory_space<vmem>>, vector<8x128xf32>,
      %c0_14 = arith.constant 0 : index
      %c0_15 = arith.constant 0 : index
      %24 = vector.load %arg6[%c0_14, %c0_15] : memref<8x128xf32, #tpu.memory_space<vmem>>, vector<8x128xf32>
      %25 = arith.addf %16, %17 : vector<16x128xf32>
      %26 = vector.shape_cast %25 : vector<16x128xf32> to vector<2x8x128xf32>
      %cst_16 = arith.constant dense<0.000000e+00> : vector<8x128xf32>
      %27 = vector.multi_reduction <add>, %26, %cst_16 [0] : vector<2x8x128xf32> to vector<8x128xf32>
      %28 = arith.addf %24, %27 : vector<8x128xf32>
      %c0_17 = arith.constant 0 : index
      %c0_18 = arith.constant 0 : index
      %29 = vector.load %arg6[%c0_17, %c0_18] : memref<8x128xf32, #tpu.memory_space<vmem>>, vector<8x128xf32>
      tpu.vector_store %arg6[%c0_17, %c0_18], %28 {strides = array<i32>} : memref<8x128xf32, #tpu.memory_space<vmem>>, vector<8x128xf32>,
    } else {
    }
    %true = arith.constant true
    %10 = arith.xori %7, %true : i1
    %11 = arith.extui %10 : i1 to i32
    %c0_i32_4 = arith.constant 0 : i32
    %12 = arith.cmpi ne, %11, %c0_i32_4 : i32
    scf.if %12 {
      %c0 = arith.constant 0 : index
      %c0_7 = arith.constant 0 : index
      %16 = vector.load %arg2[%c0, %c0_7] : memref<16x128xf32, #tpu.memory_space<vmem>>, vector<16x128xf32>
      %c0_8 = arith.constant 0 : index
      %c0_9 = arith.constant 0 : index
      %17 = vector.load %arg3[%c0_8, %c0_9] : memref<16x128xf32, #tpu.memory_space<vmem>>, vector<16x128xf32>
      %18 = tpu.iota {dimensions = array<i32: 0>} : vector<16x128xi32>
      %19 = vector.broadcast %5 : i32 to vector<16x128xi32>
      %20 = arith.addi %18, %19 : vector<16x128xi32>
      %c16_i32_10 = arith.constant 16 : i32
      %21 = vector.broadcast %c16_i32_10 : i32 to vector<16x128xi32>
      %22 = arith.cmpi slt, %20, %21 : vector<16x128xi32>
      %cst = arith.constant 0.000000e+00 : f32
      %23 = vector.broadcast %cst : f32 to vector<16x128xf32>
      %24 = arith.select %22, %16, %23 : vector<16x128xi1>, vector<16x128xf32>
      %cst_11 = arith.constant 0.000000e+00 : f32
      %25 = vector.broadcast %cst_11 : f32 to vector<16x128xf32>
      %26 = arith.select %22, %17, %25 : vector<16x128xi1>, vector<16x128xf32>
      %c0_12 = arith.constant 0 : index
      %c0_13 = arith.constant 0 : index
      %27 = vector.load %arg5[%c0_12, %c0_13] : memref<8x128xf32, #tpu.memory_space<vmem>>, vector<8x128xf32>
      %28 = arith.mulf %24, %26 : vector<16x128xf32>
      %29 = vector.shape_cast %28 : vector<16x128xf32> to vector<2x8x128xf32>
      %cst_14 = arith.constant dense<0.000000e+00> : vector<8x128xf32>
      %30 = vector.multi_reduction <add>, %29, %cst_14 [0] : vector<2x8x128xf32> to vector<8x128xf32>
      %31 = arith.addf %27, %30 : vector<8x128xf32>
      %c0_15 = arith.constant 0 : index
      %c0_16 = arith.constant 0 : index
      %32 = vector.load %arg5[%c0_15, %c0_16] : memref<8x128xf32, #tpu.memory_space<vmem>>, vector<8x128xf32>
      tpu.vector_store %arg5[%c0_15, %c0_16], %31 {strides = array<i32>} : memref<8x128xf32, #tpu.memory_space<vmem>>, vector<8x128xf32>,
      %c0_17 = arith.constant 0 : index
      %c0_18 = arith.constant 0 : index
      %33 = vector.load %arg6[%c0_17, %c0_18] : memref<8x128xf32, #tpu.memory_space<vmem>>, vector<8x128xf32>
      %34 = arith.addf %24, %26 : vector<16x128xf32>
      %35 = vector.shape_cast %34 : vector<16x128xf32> to vector<2x8x128xf32>
      %cst_19 = arith.constant dense<0.000000e+00> : vector<8x128xf32>
      %36 = vector.multi_reduction <add>, %35, %cst_19 [0] : vector<2x8x128xf32> to vector<8x128xf32>
      %37 = arith.addf %33, %36 : vector<8x128xf32>
      %c0_20 = arith.constant 0 : index
      %c0_21 = arith.constant 0 : index
      %38 = vector.load %arg6[%c0_20, %c0_21] : memref<8x128xf32, #tpu.memory_space<vmem>>, vector<8x128xf32>
      tpu.vector_store %arg6[%c0_20, %c0_21], %37 {strides = array<i32>} : memref<8x128xf32, #tpu.memory_space<vmem>>, vector<8x128xf32>,
    } else {
    }
    %c0_i32_5 = arith.constant 0 : i32
    %13 = arith.cmpi eq, %arg1, %c0_i32_5 : i32
    %14 = arith.extui %13 : i1 to i32
    %c0_i32_6 = arith.constant 0 : i32
    %15 = arith.cmpi ne, %14, %c0_i32_6 : i32
    scf.if %15 {
      %c0 = arith.constant 0 : index
      %c0_7 = arith.constant 0 : index
      %16 = vector.load %arg5[%c0, %c0_7] : memref<8x128xf32, #tpu.memory_space<vmem>>, vector<8x128xf32>
      %17 = vector.shape_cast %16 : vector<8x128xf32> to vector<1x8x128xf32>
      %cst = arith.constant dense<0.000000e+00> : vector<1xf32>
      %18 = vector.multi_reduction <add>, %17, %cst [1, 2] : vector<1x8x128xf32> to vector<1xf32>
      %19 = vector.shape_cast %18 : vector<1xf32> to vector<1x1x1xf32>
      %20 = vector.extract %19[0, 0, 0] : f32 from vector<1x1x1xf32>
      %c0_8 = arith.constant 0 : index
      %c0_9 = arith.constant 0 : index
      %21 = vector.load %arg6[%c0_8, %c0_9] : memref<8x128xf32, #tpu.memory_space<vmem>>, vector<8x128xf32>
      %22 = vector.shape_cast %21 : vector<8x128xf32> to vector<1x8x128xf32>
      %cst_10 = arith.constant dense<0.000000e+00> : vector<1xf32>
      %23 = vector.multi_reduction <add>, %22, %cst_10 [1, 2] : vector<1x8x128xf32> to vector<1xf32>
      %24 = vector.shape_cast %23 : vector<1xf32> to vector<1x1x1xf32>
      %25 = vector.extract %24[0, 0, 0] : f32 from vector<1x1x1xf32>
      %26 = tpu.iota {dimensions = array<i32: 1>} : vector<1x8x128xi32>
      %27 = tpu.iota {dimensions = array<i32: 2>} : vector<1x8x128xi32>
      %c0_i32_11 = arith.constant 0 : i32
      %28 = vector.broadcast %c0_i32_11 : i32 to vector<1x8x128xi32>
      %29 = arith.cmpi eq, %26, %28 : vector<1x8x128xi32>
      %c0_i32_12 = arith.constant 0 : i32
      %30 = vector.broadcast %c0_i32_12 : i32 to vector<1x8x128xi32>
      %31 = arith.cmpi eq, %27, %30 : vector<1x8x128xi32>
      %32 = arith.andi %29, %31 : vector<1x8x128xi1>
      %c0_i32_13 = arith.constant 0 : i32
      %33 = vector.broadcast %c0_i32_13 : i32 to vector<1x8x128xi32>
      %34 = arith.cmpi eq, %26, %33 : vector<1x8x128xi32>
      %c1_i32_14 = arith.constant 1 : i32
      %35 = vector.broadcast %c1_i32_14 : i32 to vector<1x8x128xi32>
      %36 = arith.cmpi eq, %27, %35 : vector<1x8x128xi32>
      %37 = arith.andi %34, %36 : vector<1x8x128xi1>
      %cst_15 = arith.constant 0.000000e+00 : f32
      %38 = vector.broadcast %25 : f32 to vector<1x8x128xf32>
      %39 = vector.broadcast %cst_15 : f32 to vector<1x8x128xf32>
      %40 = arith.select %37, %38, %39 : vector<1x8x128xi1>, vector<1x8x128xf32>
      %41 = vector.broadcast %20 : f32 to vector<1x8x128xf32>
      %42 = arith.select %32, %41, %40 : vector<1x8x128xi1>, vector<1x8x128xf32>
      %c0_16 = arith.constant 0 : index
      %c0_17 = arith.constant 0 : index
      %c0_18 = arith.constant 0 : index
      %43 = vector.load %arg4[%c0_16, %c0_17, %c0_18] : memref<1x8x128xf32, #tpu.memory_space<vmem>>, vector<1x8x128xf32>
      tpu.vector_store %arg4[%c0_16, %c0_17, %c0_18], %42 {strides = array<i32>} : memref<1x8x128xf32, #tpu.memory_space<vmem>>, vector<1x8x128xf32>,
    } else {
    }
    return
  }
  func.func @transform_0(%arg0: i32, %arg1: i32) -> (i32, i32) {
    %c1_i32 = arith.constant 1 : i32
    %0 = arith.muli %arg0, %c1_i32 : i32
    %1 = arith.addi %0, %arg1 : i32
    %c0_i32 = arith.constant 0 : i32
    %2 = arith.minsi %1, %c0_i32 : i32
    %c0_i32_0 = arith.constant 0 : i32
    %c0_i32_1 = arith.constant 0 : i32
    return %2, %c0_i32_0 : i32, i32
  }
  func.func @transform_1(%arg0: i32, %arg1: i32) -> (i32, i32) {
    %c1_i32 = arith.constant 1 : i32
    %0 = arith.muli %arg0, %c1_i32 : i32
    %1 = arith.addi %0, %arg1 : i32
    %c0_i32 = arith.constant 0 : i32
    %2 = arith.minsi %1, %c0_i32 : i32
    %c0_i32_0 = arith.constant 0 : i32
    %c0_i32_1 = arith.constant 0 : i32
    return %2, %c0_i32_0 : i32, i32
  }
  func.func @transform_2(%arg0: i32, %arg1: i32) -> (i32, i32, i32) {
    %c0_i32 = arith.constant 0 : i32
    %c0_i32_0 = arith.constant 0 : i32
    %c0_i32_1 = arith.constant 0 : i32
    return %arg0, %c0_i32, %c0_i32_0 : i32, i32, i32
  }
}

</mosaic_0001>

<llo_original>
// kernel: tpu_custom_call.1
$region0: #{tpu_custom_call.1}
  #allocation0 [shape = 'u32[]', space=smem, size = 0x4, offset = 0x4, fixed_abs, tag = 'smem constant byte address 0x4 - core index']
  #allocation1 [shape = 'u32[144,128]{1,0:T(1,128)}', space=vmem, size = 0x12000, scoped, tag = 'internal scratch']
  #allocation2 [shape = 'f32[8,128]{1,0:T(8,128)}', space=vmem, size = 0x1000, scoped, tag = 'scratch operand']
  #allocation3 [shape = 'f32[8,128]{1,0:T(8,128)}', space=vmem, size = 0x1000, scoped, tag = 'scratch operand']
  %s0 = inlined_call_operand.hbm [shape: f32[16,128], index: 0, kind: input, shape index: {}]
  %s1 = inlined_call_operand.hbm [shape: f32[16,128], index: 1, kind: input, shape index: {}]
  %s2 = inlined_call_operand.hbm [shape: f32[1,8,128], index: 2, kind: output, shape index: {}]
  %s3 = sld [smem:[#allocation0]]
  $region42: #{tpu_custom_call.1} parent=0
    _
  %s5 = ssub.s32 1, %s3
  %s6 = scalar_select 0, %s5, %s3
  $region1: #{tpu_custom_call.1} parent=0
    #allocation4 [shape = 'u8[8192]{0}', space=vmem, size = 0x2000, scoped, tag = 'input window, operand 0, single buffered']
    #allocation5 [shape = 's32[1]{0}', space=sflag, size = 0x4, scoped, tag = 'scoped memory for tpu_custom_call.1']
    #allocation6 [shape = 's32[1]{0}', space=sflag, size = 0x4, scoped, tag = 'scoped memory for tpu_custom_call.1']
    #allocation7 [shape = 'u8[8192]{0}', space=vmem, size = 0x2000, scoped, tag = 'input window, operand 1, single buffered']
    #allocation8 [shape = 's32[1]{0}', space=sflag, size = 0x4, scoped, tag = 'scoped memory for tpu_custom_call.1']
    #allocation9 [shape = 'u8[4096]{0}', space=vmem, size = 0x1000, scoped, tag = 'output window, operand 0, single buffered']
    %7 = vsyncpa [#allocation5], 0
    %8 = vsyncpa [#allocation8], 0
    %9 = vsyncpa [#allocation6], 0
    // Predicated region
    $region2: #{tpu_custom_call.1} parent=1 // pred_check
      _
    $region3: #{tpu_custom_call.1} parent=1 // pred_check_branch
      %11 = sbr.rel (0) target = $region5
    $region4: #{tpu_custom_call.1} parent=1 // pred_region
      %s12 = sadd.s32 0, 0
      %p13 = scmp.lt.s32.totalorder %s12, 0
      %s14 = scalar_select %p13, %s12, 0
      %s15 = smul.u32 2, %s14
      %s17 = ssub.s32 256, 256
      %18 = vsyncadd [#allocation5], %s17
      %s19 = smul.addr %s15, 128
      %s20 = scalar_lea.hbm %s0, %s19
      %s21 = sshll.u32 [#allocation4], 4
      %s22 = int_to_ptr.vmem [resolvable:$true] %s21
      %27 = dma.hbm_to_vmem [thread:$0]  %s20, 256, %s22, [#allocation5], 128, 128, 8
    $region5: #{tpu_custom_call.1} parent=1 // pred_fallthru
      _
    // Predicated region
    $region6: #{tpu_custom_call.1} parent=1 // pred_check
      _
    $region7: #{tpu_custom_call.1} parent=1 // pred_check_branch
      %29 = sbr.rel (0) target = $region9
    $region8: #{tpu_custom_call.1} parent=1 // pred_region
      %s30 = sadd.s32 0, 0
      %p31 = scmp.lt.s32.totalorder %s30, 0
      %s32 = scalar_select %p31, %s30, 0
      %s33 = smul.u32 2, %s32
      %s35 = ssub.s32 256, 256
      %36 = vsyncadd [#allocation8], %s35
      %s37 = smul.addr %s33, 128
      %s38 = scalar_lea.hbm %s1, %s37
      %s39 = sshll.u32 [#allocation7], 4
      %s40 = int_to_ptr.vmem [resolvable:$true] %s39
      %45 = dma.hbm_to_vmem [thread:$0]  %s38, 256, %s40, [#allocation8], 128, 128, 8
    $region9: #{tpu_custom_call.1} parent=1 // pred_fallthru
      _
    // Predicated region
    $region10: #{tpu_custom_call.1} parent=1 // pred_check
      _
    $region11: #{tpu_custom_call.1} parent=1 // pred_check_branch
      %47 = sbr.rel (0) target = $region13
    $region12: #{tpu_custom_call.1} parent=1 // pred_region
      %48 = dma.done [#allocation5], 256
    $region13: #{tpu_custom_call.1} parent=1 // pred_fallthru
      _
    // Predicated region
    $region14: #{tpu_custom_call.1} parent=1 // pred_check
      _
    $region15: #{tpu_custom_call.1} parent=1 // pred_check_branch
      %50 = sbr.rel (0) target = $region17
    $region16: #{tpu_custom_call.1} parent=1 // pred_region
      %51 = dma.done [#allocation8], 256
    $region17: #{tpu_custom_call.1} parent=1 // pred_fallthru
      _
    %s52 = sadd.s32 0, 0
    %p53 = scmp.lt.s32.totalorder %s52, 0
    %s54 = scalar_select %p53, %s52, 0
    %s55 = smul.u32 2, %s54
    %s56 = sadd.s32 0, 0
    %p57 = scmp.lt.s32.totalorder %s56, 0
    %s58 = scalar_select %p57, %s56, 0
    %s59 = smul.u32 2, %s58
    %p60 = scmp.eq.s32.totalorder 0, 0
    // Predicated region
    $region18: #{tpu_custom_call.1} parent=1 // pred_check
      %p61 = pneg %p60
    $region19: #{tpu_custom_call.1} parent=1 // pred_check_branch
      %63 = sbr.rel (%p61) target = $region21
    $region20: #{tpu_custom_call.1} parent=1 // pred_region
      %64 = vst [vmem:[#allocation2] sm:$0xff] 0.0
      %65 = vst [vmem:[#allocation3] sm:$0xff] 0.0
    $region21: #{tpu_custom_call.1} parent=1 // pred_fallthru
      _
    %s66 = sadd.s32 0, 0
    %s67 = smul.u32 %s66, 16
    %s68 = sadd.s32 %s67, 16
    %p69 = scmp.le.s32.totalorder %s68, 16
    // Predicated region
    $region22: #{tpu_custom_call.1} parent=1 // pred_check
      %p70 = pneg %p69
    $region23: #{tpu_custom_call.1} parent=1 // pred_check_branch
      %72 = sbr.rel (%p70) target = $region25
    $region24: #{tpu_custom_call.1} parent=1 // pred_region
      %v73 = vld [vmem:[#allocation4] sm:$0xff]
      %v74 = vld [vmem:[#allocation4 + $0x8] sm:$0xff]
      %v75 = vld [vmem:[#allocation7] sm:$0xff]
      %v76 = vld [vmem:[#allocation7 + $0x8] sm:$0xff]
      %v77 = vld [vmem:[#allocation2] sm:$0xff]
      %v78 = vmul.f32 %v73, %v75
      %v79 = vmul.f32 %v74, %v76
      %v80 = vadd.f32 %v78, %v79
      %v81 = vadd.f32 %v77, %v80
      %82 = vst [vmem:[#allocation2] sm:$0xff] %v81
      %v83 = vld [vmem:[#allocation3] sm:$0xff]
      %v84 = vadd.f32 %v73, %v75
      %v85 = vadd.f32 %v74, %v76
      %v86 = vadd.f32 %v84, %v85
      %v87 = vadd.f32 %v83, %v86
      %88 = vst [vmem:[#allocation3] sm:$0xff] %v87
    $region25: #{tpu_custom_call.1} parent=1 // pred_fallthru
      _
    %p89 = scmp.gt.s32.totalorder %s68, 16
    // Predicated region
    $region26: #{tpu_custom_call.1} parent=1 // pred_check
      %p90 = pneg %p89
    $region27: #{tpu_custom_call.1} parent=1 // pred_check_branch
      %92 = sbr.rel (%p90) target = $region29
    $region28: #{tpu_custom_call.1} parent=1 // pred_region
      %v93 = vld [vmem:[#allocation4] sm:$0xff]
      %v94 = vld [vmem:[#allocation4 + $0x8] sm:$0xff]
      %v95 = vld [vmem:[#allocation7] sm:$0xff]
      %v96 = vld [vmem:[#allocation7 + $0x8] sm:$0xff]
      %v97 = vlaneseq
      %v98 = vshrl.u32 %v97, 7
      %v99 = vadd.s32 %v98, 8
      %v100 = vstv %s67
      %v101 = vadd.s32 %v98, %v100
      %v102 = vadd.s32 %v99, %v100
      %vm103 = vcmp.lt.s32.totalorder %v101, 16
      %vm104 = vcmp.lt.s32.totalorder %v102, 16
      %v105 = vsel %vm103, %v93, 0.0
      %v106 = vsel %vm104, %v94, 0.0
      %v107 = vsel %vm103, %v95, 0.0
      %v108 = vsel %vm104, %v96, 0.0
      %v109 = vld [vmem:[#allocation2] sm:$0xff]
      %v110 = vmul.f32 %v105, %v107
      %v111 = vmul.f32 %v106, %v108
      %v112 = vadd.f32 %v110, %v111
      %v113 = vadd.f32 %v109, %v112
      %114 = vst [vmem:[#allocation2] sm:$0xff] %v113
      %v115 = vld [vmem:[#allocation3] sm:$0xff]
      %v116 = vadd.f32 %v105, %v107
      %v117 = vadd.f32 %v106, %v108
      %v118 = vadd.f32 %v116, %v117
      %v119 = vadd.f32 %v115, %v118
      %120 = vst [vmem:[#allocation3] sm:$0xff] %v119
    $region29: #{tpu_custom_call.1} parent=1 // pred_fallthru
      _
    // Predicated region
    $region30: #{tpu_custom_call.1} parent=1 // pred_check
      %p121 = pneg %p60
    $region31: #{tpu_custom_call.1} parent=1 // pred_check_branch
      %123 = sbr.rel (%p121) target = $region33
    $region32: #{tpu_custom_call.1} parent=1 // pred_region
      %v124 = vld [vmem:[#allocation2] sm:$0xff]
      %125 = vadd.xlane.f32.xlu0 %v124
      %v126 = vpop.xlane.xlu0 %125
      %v127 = vrot.slane %v126, 4
      %v128 = vadd.f32 %v126, %v127
      %v129 = vrot.slane %v128, 2
      %v130 = vadd.f32 %v128, %v129
      %v131 = vrot.slane %v130, 1
      %v132 = vadd.f32 %v130, %v131
      %s133 = vtos %v132
      %v134 = vld [vmem:[#allocation3] sm:$0xff]
      %135 = vadd.xlane.f32.xlu0 %v134
      %v136 = vpop.xlane.xlu0 %135
      %v137 = vrot.slane %v136, 4
      %v138 = vadd.f32 %v136, %v137
      %v139 = vrot.slane %v138, 2
      %v140 = vadd.f32 %v138, %v139
      %v141 = vrot.slane %v140, 1
      %v142 = vadd.f32 %v140, %v141
      %s143 = vtos %v142
      %v144 = vlaneseq
      %v145 = vshrl.u32 %v144, 7
      %v146 = vlaneseq
      %v147 = vand.u32 %v146, 127
      %vm148 = vcmp.eq.s32.totalorder %v145, 0
      %vm149 = vcmp.eq.s32.totalorder %v147, 0
      %vm150 = vmand %vm148, %vm149
      %vm151 = vcmp.eq.s32.totalorder %v147, 1
      %vm152 = vmand %vm148, %vm151
      %v153 = vstv %s143
      %v154 = vsel %vm152, %v153, 0.0
      %v155 = vstv %s133
      %v156 = vsel %vm150, %v155, %v154
      %157 = vst [vmem:[#allocation9] sm:$0xff] %v156
    $region33: #{tpu_custom_call.1} parent=1 // pred_fallthru
      _
    // Predicated region
    $region34: #{tpu_custom_call.1} parent=1 // pred_check
      _
    $region35: #{tpu_custom_call.1} parent=1 // pred_check_branch
      %159 = sbr.rel (0) target = $region37
    $region36: #{tpu_custom_call.1} parent=1 // pred_region
      %s161 = ssub.s32 128, 128
      %162 = vsyncadd [#allocation6], %s161
      %s164 = sshll.u32 [#allocation9], 4
      %s165 = int_to_ptr.vmem [resolvable:$true] %s164
      %167 = dma.vmem_to_hbm [thread:$0]  %s165, 128, %s2, [#allocation6]
    $region37: #{tpu_custom_call.1} parent=1 // pred_fallthru
      _
    // Predicated region
    $region38: #{tpu_custom_call.1} parent=1 // pred_check
      _
    $region39: #{tpu_custom_call.1} parent=1 // pred_check_branch
      %169 = sbr.rel (0) target = $region41
    $region40: #{tpu_custom_call.1} parent=1 // pred_region
      %170 = dma.done [#allocation6], 128
    $region41: #{tpu_custom_call.1} parent=1 // pred_fallthru
      _
    %171 = vsyncpa [#allocation5], 1
    %172 = vsyncpa [#allocation8], 1
    %173 = vsyncpa [#allocation6], 1

</llo_original>
